<compile_context>
chip_gen: v7x
topology: tpu7x:2x2x1
jax: 0.10.0
libtpu: 0.0.40
codegen_flags: <defaults>
</compile_context>

<pallas_src>
import functools

import numpy as np
import jax
import jax.numpy as jnp
from jax.experimental import pallas as pl
from jax.experimental.pallas import tpu as pltpu


_MXU_ALIGN = 256                      # full MXU width on v6e/v7x; multiple of v5e's 128
_H2_CHUNK_BUDGET = 2 * 1024 * 1024    # VMEM budget for the f32 ReLU chunk (+ cast copy)


def _encoder_kernel(x_ref, w1_ref, b1_ref, w2_ref, b2_ref, o_ref, *, h2_chunk):
    """One (tm, E) row tile -> (tm, H) output tile, fully fused in VMEM.

    The ragged last grid block computes on stale rows of the padded x tile.
    That is correct because every output row depends only on its own input row
    and out-of-range rows are clipped on store.  Do NOT add cross-row ops
    (LayerNorm / pooling) to this body without an explicit row mask.
    """
    x = x_ref[...].astype(w1_ref.dtype)          # VPU cast; no-op on the f32 path
    h2 = w1_ref.shape[1]

    if h2_chunk >= h2:
        # Simple fused path: (tm, 2H) f32 intermediate fits comfortably.
        h = jnp.dot(x, w1_ref[...], preferred_element_type=jnp.float32)
        h = jnp.maximum(h + b1_ref[...], 0.0)
        out = jnp.dot(h.astype(w2_ref.dtype), w2_ref[...],
                      preferred_element_type=jnp.float32)
    else:
        # Large-2H path (v7x VMEM discipline): stream 2H in MXU-aligned chunks
        # and accumulate into a (tm, H) f32 accumulator instead of building
        # the full (tm, 2H) f32 intermediate.
        out = jnp.zeros((x.shape[0], w2_ref.shape[1]), jnp.float32)
        for c0 in range(0, h2, h2_chunk):
            cw = min(h2_chunk, h2 - c0)
            hc = jnp.dot(x, w1_ref[:, c0:c0 + cw],
                         preferred_element_type=jnp.float32)
            hc = jnp.maximum(hc + b1_ref[:, c0:c0 + cw], 0.0)
            out = out + jnp.dot(hc.astype(w2_ref.dtype), w2_ref[c0:c0 + cw, :],
                                preferred_element_type=jnp.float32)

    o_ref[...] = (out + b2_ref[...]).astype(o_ref.dtype)


def _pick_row_tile(m, tile_m):
    """MXU-aligned streamed row tile; guarantees >= 2 grid steps when m > 512."""
    if m <= 2 * _MXU_ALIGN:
        return m                                          # single full-extent block
    tm = max(_MXU_ALIGN, (tile_m // _MXU_ALIGN) * _MXU_ALIGN)
    if tm >= m:
        # Requested tile would swallow the whole matrix -> split into >= 2
        # MXU-aligned steps so ("parallel",) can shard across v7x's two TCs.
        tm = pl.cdiv(pl.cdiv(m, 2), _MXU_ALIGN) * _MXU_ALIGN
    return tm


def _pick_h2_chunk(tm, h2):
    """Largest MXU-aligned 2H chunk whose f32 + cast temporaries fit the budget."""
    if tm * h2 * 6 <= _H2_CHUNK_BUDGET:                   # 4B f32 + 2B bf16 copy
        return h2
    chunk = (_H2_CHUNK_BUDGET // (tm * 6)) // _MXU_ALIGN * _MXU_ALIGN
    return int(max(_MXU_ALIGN, min(chunk, h2)))


def _vmem_cap_bytes():
    try:
        return int(pltpu.get_tpu_info().vmem_capacity_bytes)
    except Exception:
        return 64 * 1024 * 1024                           # assume most-constrained gen (v7x)


@functools.partial(
    jax.jit,
    static_argnames=("tile_m", "compute_dtype", "out_dtype", "input_buffers"),
)
def feature_encoder_forward(embeddings, w1, b1, w2, b2, *, tile_m=512,
                            compute_dtype=jnp.bfloat16, out_dtype=None,
                            input_buffers=2):
    """embeddings: [B, S, E] -> node_features: [B, S, H].

    dtype contract:
      * embeddings may be f32 or bf16 (bf16 from the producer halves the
        dominant HBM read of this memory-bound kernel).
      * w1/w2 may be pre-cast to compute_dtype once (cast_params_for_mxu);
        this wrapper only casts if the dtype differs.
      * out_dtype defaults to embeddings.dtype.
      * compute_dtype=jnp.float32 gives f32-faithful nn.Linear numerics; the
        bf16 default trades ~1% error for ~2x MXU throughput and half the
        weight DMA bytes (explicit, documented choice).
    """
    B, S, E = embeddings.shape
    H2 = w1.shape[1]           # hidden_dim * 2
    H = w2.shape[1]            # hidden_dim
    if out_dtype is None:
        out_dtype = embeddings.dtype

    M = B * S
    x = embeddings.reshape(M, E)                # free row-major reshape

    tm = _pick_row_tile(M, tile_m)
    grid = (pl.cdiv(M, tm),)
    h2_chunk = _pick_h2_chunk(tm, H2)

    # Weights feed the MXU in compute_dtype; cast is skipped when the caller
    # already pre-cast them (recommended for repeated calls).
    w1c = w1 if w1.dtype == compute_dtype else w1.astype(compute_dtype)
    w2c = w2 if w2.dtype == compute_dtype else w2.astype(compute_dtype)
    b1f = b1.astype(jnp.float32)
    b2f = b2.astype(jnp.float32)

    in_b = embeddings.dtype.itemsize
    out_b = np.dtype(out_dtype).itemsize
    c_b = np.dtype(compute_dtype).itemsize

    # VMEM budget: pipeline-buffered x/o tiles, single-buffered weights/biases,
    # plus in-kernel temporaries (x cast, f32 ReLU chunk + its cast, f32 acc).
    est = (input_buffers * tm * E * in_b        # streamed x tile
           + 2 * tm * H * out_b                 # double-buffered output tile
           + (E * H2 + H2 * H) * c_b            # W1 / W2 (single-buffered)
           + (H2 + H) * 4                       # biases (f32)
           + tm * E * c_b                       # in-kernel cast of x
           + tm * h2_chunk * (4 + c_b)          # f32 ReLU chunk + cast copy
           + tm * H * 4)                        # f32 accumulator
    cap = min(40 * 1024 * 1024, (5 * _vmem_cap_bytes()) // 8)
    vmem_limit = int(min(max(2 * est, 4 * 1024 * 1024), cap))

    # Advisory cost so XLA schedules this custom call well inside a larger graph.
    cost = pl.CostEstimate(
        flops=2 * M * (E * H2 + H2 * H),
        transcendentals=0,
        bytes_accessed=(M * E * in_b + M * H * out_b
                        + (E * H2 + H2 * H) * c_b + (H2 + H) * 4),
    )

    # Streamed x tile: default double buffering; input_buffers=3 deepens the
    # pipeline if DMA is exposed (most likely on v5e's low HBM BW).
    if input_buffers == 2:
        x_spec = pl.BlockSpec((tm, E), lambda i: (i, 0))
    else:
        x_spec = pl.BlockSpec((tm, E), lambda i: (i, 0),
                              pipeline_mode=pl.Buffered(input_buffers))

    # Constant-index weight/bias operands: single-buffer them (the second
    # pipeline buffer is pure VMEM waste; matters most on v7x's 64 MiB VMEM).
    def _resident(shape):
        return pl.BlockSpec(shape, lambda i: (0, 0), pipeline_mode=pl.Buffered(1))

    kernel = functools.partial(_encoder_kernel, h2_chunk=h2_chunk)

    out = pl.pallas_call(
        kernel,
        out_shape=jax.ShapeDtypeStruct((M, H), out_dtype),
        grid_spec=pltpu.PrefetchScalarGridSpec(
            num_scalar_prefetch=0,
            grid=grid,
            in_specs=[
                x_spec,                      # streamed x tile
                _resident((E, H2)),          # W1 (resident, single-buffered)
                _resident((1, H2)),          # b1
                _resident((H2, H)),          # W2 (resident, single-buffered)
                _resident((1, H)),           # b2
            ],
            out_specs=pl.BlockSpec((tm, H), lambda i: (i, 0)),
        ),
        compiler_params=pltpu.CompilerParams(
            dimension_semantics=("parallel",),   # shardable across v7x's 2 TCs
            vmem_limit_bytes=vmem_limit,
        ),
        cost_estimate=cost,
    )(x, w1c, b1f, w2c, b2f)

    return out.reshape(B, S, H)


def cast_params_for_mxu(w1, w2, compute_dtype=jnp.bfloat16):
    """Pre-cast weights once at parameter setup (hoists the per-call astype)."""
    return w1.astype(compute_dtype), w2.astype(compute_dtype)


def init_params(key, embedding_dim, hidden_dim):
    """Deterministic init mirroring nn.Linear's Kaiming-uniform / bias-uniform."""
    k1, k2, k3, k4 = jax.random.split(key, 4)
    h2 = hidden_dim * 2

    bound1 = 1.0 / jnp.sqrt(embedding_dim)
    w1 = jax.random.uniform(k1, (embedding_dim, h2), jnp.float32, -bound1, bound1)
    b1 = jax.random.uniform(k2, (1, h2), jnp.float32, -bound1, bound1)

    bound2 = 1.0 / jnp.sqrt(h2)
    w2 = jax.random.uniform(k3, (h2, hidden_dim), jnp.float32, -bound2, bound2)
    b2 = jax.random.uniform(k4, (1, hidden_dim), jnp.float32, -bound2, bound2)
    return w1, b1, w2, b2


def reference_forward(embeddings, w1, b1, w2, b2):
    h = jnp.maximum(embeddings @ w1 + b1[0], 0.0)
    return h @ w2 + b2[0]


if __name__ == "__main__":
    # Small shapes consistent with the module's forward:
    #   embeddings: [batch=2, seq_len=24, embedding_dim=32], hidden_dim=32.
    key = jax.random.PRNGKey(0)
    k_emb, k_param = jax.random.split(key)

    batch, seq_len, embedding_dim, hidden_dim = 2, 24, 32, 32
    embeddings = jax.random.normal(
        k_emb, (batch, seq_len, embedding_dim), jnp.float32
    )
    w1, b1, w2, b2 = init_params(k_param, embedding_dim, hidden_dim)
    ref = reference_forward(embeddings, w1, b1, w2, b2)

    # 1) Default path: weights pre-cast once to bf16, f32 accumulation,
    #    single full-extent block (M = 48 <= 512).
    w1_c, w2_c = cast_params_for_mxu(w1, w2)
    node_features = feature_encoder_forward(embeddings, w1_c, b1, w2_c, b2)
    node_features = jax.block_until_ready(node_features)
    assert node_features.shape == (batch, seq_len, hidden_dim)
    assert node_features.dtype == jnp.float32
    assert jnp.allclose(node_features, ref, atol=5e-2, rtol=5e-2)

    # 2) bf16 embedding stream (producer-side cast) + bf16 output: halves the
    #    dominant HBM read/write of this memory-bound kernel.
    node_features_bf16 = feature_encoder_forward(
        embeddings.astype(jnp.bfloat16), w1_c, b1, w2_c, b2
    )
    node_features_bf16 = jax.block_until_ready(node_features_bf16)
    assert node_features_bf16.dtype == jnp.bfloat16
    assert jnp.allclose(node_features_bf16.astype(jnp.float32), ref,
                        atol=1e-1, rtol=1e-1)

    # 3) f32-faithful path on a larger input exercising the multi-step grid
    #    (M = 600 -> tm = 512, 2 parallel steps) and the clipped ragged block.
    embeddings2 = jax.random.normal(
        jax.random.PRNGKey(1), (3, 200, embedding_dim), jnp.float32
    )
    ref2 = reference_forward(embeddings2, w1, b1, w2, b2)
    node_features2 = feature_encoder_forward(
        embeddings2, w1, b1, w2, b2, compute_dtype=jnp.float32
    )
    node_features2 = jax.block_until_ready(node_features2)
    assert node_features2.shape == (3, 200, hidden_dim)
    assert jnp.allclose(node_features2, ref2, atol=1e-4, rtol=1e-4)

    print("KERNEL_OK")
</pallas_src>

<mosaic_0001>
module attributes {stable_mosaic.version = 11 : i64} {
  func.func @_encoder_kernel(%arg0: i32, %arg1: memref<48x32xf32, #tpu.memory_space<vmem>>, %arg2: memref<32x64xbf16, #tpu.memory_space<vmem>>, %arg3: memref<1x64xf32, #tpu.memory_space<vmem>>, %arg4: memref<64x32xbf16, #tpu.memory_space<vmem>>, %arg5: memref<1x32xf32, #tpu.memory_space<vmem>>, %arg6: memref<48x32xf32, #tpu.memory_space<vmem>>) attributes {dimension_semantics = [#tpu.dimension_semantics<parallel>], iteration_bounds = array<i64: 1>, scalar_prefetch = 0 : i64, scratch_operands = 0 : i64, tpu.core_type = #tpu.core_type<tc>, window_params = [{transform_indices = @transform_0, window_bounds = array<i64: 48, 32>}, {pipeline_mode = #tpu.pipeline_mode<synchronous>, transform_indices = @transform_1, window_bounds = array<i64: 32, 64>}, {pipeline_mode = #tpu.pipeline_mode<synchronous>, transform_indices = @transform_2, window_bounds = array<i64: 1, 64>}, {pipeline_mode = #tpu.pipeline_mode<synchronous>, transform_indices = @transform_3, window_bounds = array<i64: 64, 32>}, {pipeline_mode = #tpu.pipeline_mode<synchronous>, transform_indices = @transform_4, window_bounds = array<i64: 1, 32>}, {transform_indices = @transform_5, window_bounds = array<i64: 48, 32>}]} {
    %c0 = arith.constant 0 : index
    %c0_0 = arith.constant 0 : index
    %0 = vector.load %arg1[%c0, %c0_0] : memref<48x32xf32, #tpu.memory_space<vmem>>, vector<48x32xf32>
    %1 = arith.truncf %0 : vector<48x32xf32> to vector<48x32xbf16>
    %c0_1 = arith.constant 0 : index
    %c0_2 = arith.constant 0 : index
    %2 = vector.load %arg2[%c0_1, %c0_2] : memref<32x64xbf16, #tpu.memory_space<vmem>>, vector<32x64xbf16>
    %cst = arith.constant dense<0.000000e+00> : vector<48x64xf32>
    %3 = tpu.matmul %1, %2, %cst {dimension_numbers = #tpu.dot_dimension_numbers<[1], [0], [0], [1], [0, 0, 1, 1], [], []>} : vector<48x32xbf16>, vector<32x64xbf16>, vector<48x64xf32> -> vector<48x64xf32>
    %c0_3 = arith.constant 0 : index
    %c0_4 = arith.constant 0 : index
    %4 = vector.load %arg3[%c0_3, %c0_4] : memref<1x64xf32, #tpu.memory_space<vmem>>, vector<1x64xf32>
    %5 = vector.broadcast %4 : vector<1x64xf32> to vector<48x64xf32>
    %6 = arith.addf %3, %5 : vector<48x64xf32>
    %cst_5 = arith.constant 0.000000e+00 : f32
    %7 = vector.broadcast %cst_5 : f32 to vector<48x64xf32>
    %8 = arith.maximumf %6, %7 : vector<48x64xf32>
    %9 = arith.truncf %8 : vector<48x64xf32> to vector<48x64xbf16>
    %c0_6 = arith.constant 0 : index
    %c0_7 = arith.constant 0 : index
    %10 = vector.load %arg4[%c0_6, %c0_7] : memref<64x32xbf16, #tpu.memory_space<vmem>>, vector<64x32xbf16>
    %cst_8 = arith.constant dense<0.000000e+00> : vector<48x32xf32>
    %11 = tpu.matmul %9, %10, %cst_8 {dimension_numbers = #tpu.dot_dimension_numbers<[1], [0], [0], [1], [0, 0, 1, 1], [], []>} : vector<48x64xbf16>, vector<64x32xbf16>, vector<48x32xf32> -> vector<48x32xf32>
    %c0_9 = arith.constant 0 : index
    %c0_10 = arith.constant 0 : index
    %12 = vector.load %arg5[%c0_9, %c0_10] : memref<1x32xf32, #tpu.memory_space<vmem>>, vector<1x32xf32>
    %13 = vector.broadcast %12 : vector<1x32xf32> to vector<48x32xf32>
    %14 = arith.addf %11, %13 : vector<48x32xf32>
    %c0_11 = arith.constant 0 : index
    %c0_12 = arith.constant 0 : index
    %15 = vector.load %arg6[%c0_11, %c0_12] : memref<48x32xf32, #tpu.memory_space<vmem>>, vector<48x32xf32>
    tpu.vector_store %arg6[%c0_11, %c0_12], %14 {strides = array<i32>} : memref<48x32xf32, #tpu.memory_space<vmem>>, vector<48x32xf32>,
    return
  }
  func.func @transform_0(%arg0: i32) -> (i32, i32) {
    %c0_i32 = arith.constant 0 : i32
    %c0_i32_0 = arith.constant 0 : i32
    return %arg0, %c0_i32 : i32, i32
  }
  func.func @transform_1(%arg0: i32) -> (i32, i32) {
    %c0_i32 = arith.constant 0 : i32
    %c0_i32_0 = arith.constant 0 : i32
    %c0_i32_1 = arith.constant 0 : i32
    return %c0_i32, %c0_i32_0 : i32, i32
  }
  func.func @transform_2(%arg0: i32) -> (i32, i32) {
    %c0_i32 = arith.constant 0 : i32
    %c0_i32_0 = arith.constant 0 : i32
    %c0_i32_1 = arith.constant 0 : i32
    return %c0_i32, %c0_i32_0 : i32, i32
  }
  func.func @transform_3(%arg0: i32) -> (i32, i32) {
    %c0_i32 = arith.constant 0 : i32
    %c0_i32_0 = arith.constant 0 : i32
    %c0_i32_1 = arith.constant 0 : i32
    return %c0_i32, %c0_i32_0 : i32, i32
  }
  func.func @transform_4(%arg0: i32) -> (i32, i32) {
    %c0_i32 = arith.constant 0 : i32
    %c0_i32_0 = arith.constant 0 : i32
    %c0_i32_1 = arith.constant 0 : i32
    return %c0_i32, %c0_i32_0 : i32, i32
  }
  func.func @transform_5(%arg0: i32) -> (i32, i32) {
    %c0_i32 = arith.constant 0 : i32
    %c0_i32_0 = arith.constant 0 : i32
    return %arg0, %c0_i32 : i32, i32
  }
}

</mosaic_0001>

<llo_original>
// kernel: feature_encoder_forward.1
$region0: #{feature_encoder_forward.1}
  #allocation0 [shape = 'u32[]', space=smem, size = 0x4, offset = 0x4, fixed_abs, tag = 'smem constant byte address 0x4 - core index']
  #allocation1 [shape = 'u32[144,128]{1,0:T(1,128)}', space=vmem, size = 0x12000, scoped, tag = 'internal scratch']
  %s0 = inlined_call_operand.vmem [shape: f32[48,32], index: 0, kind: input, shape index: {}]
  %s1 = inlined_call_operand.hbm [shape: bf16[32,64], index: 1, kind: input, shape index: {}]
  %s2 = inlined_call_operand.vmem [shape: f32[1,64], index: 2, kind: input, shape index: {}]
  %s3 = inlined_call_operand.vmem [shape: bf16[64,32], index: 3, kind: input, shape index: {}]
  %s4 = inlined_call_operand.vmem [shape: f32[1,32], index: 4, kind: input, shape index: {}]
  %s5 = inlined_call_operand.hbm [shape: f32[48,32], index: 5, kind: output, shape index: {}]
  %s6 = sld [smem:[#allocation0]]
  $region34: #{feature_encoder_forward.1} parent=0
    _
  %s8 = ssub.s32 1, %s6
  %s9 = scalar_select 0, %s8, %s6
  $region1: #{feature_encoder_forward.1} parent=0
    #allocation2 [shape = 'u8[8192]{0}', space=vmem, size = 0x2000, scoped, tag = 'input window, operand 1, single buffered']
    #allocation3 [shape = 's32[1]{0}', space=sflag, size = 0x4, scoped, tag = 'scoped memory for feature_encoder_forward.1']
    #allocation4 [shape = 's32[1]{0}', space=sflag, size = 0x4, scoped, tag = 'scoped memory for feature_encoder_forward.1']
    #allocation5 [shape = 'u8[24576]{0}', space=vmem, size = 0x6000, scoped, tag = 'output window, operand 0, single buffered']
    %10 = vsyncpa [#allocation3], 0
    %11 = vsyncpa [#allocation4], 0
    // Predicated region
    $region2: #{feature_encoder_forward.1} parent=1 // pred_check
      _
    $region3: #{feature_encoder_forward.1} parent=1 // pred_check_branch
      %13 = sbr.rel (0) target = $region5
    $region4: #{feature_encoder_forward.1} parent=1 // pred_region
      _
    $region5: #{feature_encoder_forward.1} parent=1 // pred_fallthru
      _
    // Predicated region
    $region6: #{feature_encoder_forward.1} parent=1 // pred_check
      _
    $region7: #{feature_encoder_forward.1} parent=1 // pred_check_branch
      %15 = sbr.rel (0) target = $region9
    $region8: #{feature_encoder_forward.1} parent=1 // pred_region
      %s17 = ssub.s32 256, 256
      %18 = vsyncadd [#allocation3], %s17
      %s19 = sshll.u32 [#allocation2], 4
      %s20 = int_to_ptr.vmem [resolvable:$true] %s19
      %25 = dma.hbm_to_vmem [thread:$0]  %s1, 256, %s20, [#allocation3], 64, 64, 4
    $region9: #{feature_encoder_forward.1} parent=1 // pred_fallthru
      _
    // Predicated region
    $region10: #{feature_encoder_forward.1} parent=1 // pred_check
      _
    $region11: #{feature_encoder_forward.1} parent=1 // pred_check_branch
      %27 = sbr.rel (0) target = $region13
    $region12: #{feature_encoder_forward.1} parent=1 // pred_region
      _
    $region13: #{feature_encoder_forward.1} parent=1 // pred_fallthru
      _
    // Predicated region
    $region14: #{feature_encoder_forward.1} parent=1 // pred_check
      _
    $region15: #{feature_encoder_forward.1} parent=1 // pred_check_branch
      %29 = sbr.rel (0) target = $region17
    $region16: #{feature_encoder_forward.1} parent=1 // pred_region
      _
    $region17: #{feature_encoder_forward.1} parent=1 // pred_fallthru
      _
    // Predicated region
    $region18: #{feature_encoder_forward.1} parent=1 // pred_check
      _
    $region19: #{feature_encoder_forward.1} parent=1 // pred_check_branch
      %31 = sbr.rel (0) target = $region21
    $region20: #{feature_encoder_forward.1} parent=1 // pred_region
      _
    $region21: #{feature_encoder_forward.1} parent=1 // pred_fallthru
      _
    // Predicated region
    $region22: #{feature_encoder_forward.1} parent=1 // pred_check
      _
    $region23: #{feature_encoder_forward.1} parent=1 // pred_check_branch
      %33 = sbr.rel (0) target = $region25
    $region24: #{feature_encoder_forward.1} parent=1 // pred_region
      %34 = dma.done [#allocation3], 256
    $region25: #{feature_encoder_forward.1} parent=1 // pred_fallthru
      _
    %v36 = vld [vmem:[%s0] sm:$0xff]
    %v37 = vld [vmem:[%s0 + $0x8] sm:$0xff]
    %v38 = vld [vmem:[%s0 + $0x10] sm:$0xff]
    %v39 = vld [vmem:[%s0 + $0x18] sm:$0xff]
    %v40 = vld [vmem:[%s0 + $0x20] sm:$0xff]
    %v41 = vld [vmem:[%s0 + $0x28] sm:$0xff]
    %v42 = vpack.c.bf16 %v37, %v36
    %v43 = vpack.c.bf16 %v39, %v38
    %v44 = vpack.c.bf16 %v41, %v40
    %v45 = vld [vmem:[#allocation2] sm:$0xf]
    %v46 = vld [vmem:[#allocation2 + $0x4] sm:$0xf]
    %v47 = vld [vmem:[#allocation2 + $0x8] sm:$0xf]
    %v48 = vld [vmem:[#allocation2 + $0xc] sm:$0xf]
    %v49 = vld [vmem:[%s2] sm:$0x1]
    %v51 = vlaneseq
    %v52 = vshrl.u32 %v51, 7
    %v53 = vsub.s32 0, %v52
    %v54 = vrot.slane %v49, %v53
    %v60 = vunpack.c.l.b16 %v45
    %v61 = vunpack.c.l.b16 %v46
    %v62 = vunpack.c.l.b16 %v47
    %v63 = vunpack.c.l.b16 %v48
    %v64 = vpack.c.b16 %v61, %v60
    %v65 = vpack.c.b16 %v63, %v62
    %vm68 = vcmask 261120
    %v70 = vsel %vm68, %v42, 0
    %v73 = vsel %vm68, %v43, 0
    %v76 = vsel %vm68, %v44, 0
    %78 = vmatprep.subr.bf16.mxu0 0
    %79 = vmatpush1.bf16.msra.mxu0 %v64
    %80 = vmatprep.subr.bf16.mxu0 0
    %81 = vmatpush1.bf16.msra.mxu0 %v65
    %82 = vmatprep.subr.bf16.mxu0 0
    %83 = vmatpush1.bf16.msra.mxu0 0
    %84 = vmatprep.subr.bf16.mxu0 0
    %85 = vmatpush1.bf16.msra.mxu0 0
    %86 = vmatprep.subr.bf16.mxu0 0
    %87 = vmatpush1.bf16.msra.mxu0 0
    %88 = vmatprep.subr.bf16.mxu0 0
    %89 = vmatpush1.bf16.msra.mxu0 0
    %90 = vmatprep.subr.bf16.mxu0 0
    %91 = vmatpush1.bf16.msra.mxu0 0
    %92 = vmatprep.subr.bf16.mxu0 0
    %93 = vmatpush1.bf16.msra.mxu0 0
    %94 = vmatprep.subr.bf16.mxu0 0
    %95 = vmatpush1.bf16.msra.mxu0 0
    %96 = vmatprep.subr.bf16.mxu0 0
    %97 = vmatpush1.bf16.msra.mxu0 0
    %98 = vmatprep.subr.bf16.mxu0 0
    %99 = vmatpush1.bf16.msra.mxu0 0
    %100 = vmatprep.subr.bf16.mxu0 0
    %101 = vmatpush1.bf16.msra.mxu0 0
    %102 = vmatprep.subr.bf16.mxu0 0
    %103 = vmatpush1.bf16.msra.mxu0 0
    %104 = vmatprep.subr.bf16.mxu0 0
    %105 = vmatpush1.bf16.msra.mxu0 0
    %106 = vmatprep.subr.bf16.mxu0 0
    %107 = vmatpush1.bf16.msra.mxu0 0
    %108 = vmatprep.subr.bf16.mxu0 0
    %109 = vmatpush1.bf16.msra.mxu0 0
    %110 = vmatprep.mubr.bf16.mxu0 0
    %111 = vmatmul.mubr.bf16.gmra.mrb[0].mxu0 %v70
    %v112 = vpop.f32.mrb[0].mxu0
    %v113 = vadd.f32 %v54, %v112
    %v114 = vpop.f32.mrb[0].mxu0
    %v115 = vpop.f32.mrb[0].mxu0
    %v116 = vadd.f32 %v54, %v115
    %v117 = vpop.f32.mrb[0].mxu0
    %118 = vmatprep.mubr.bf16.mxu0 0
    %119 = vmatmul.mubr.bf16.gmra.mrb[0].mxu0 %v73
    %v120 = vpop.f32.mrb[0].mxu0
    %v121 = vadd.f32 %v54, %v120
    %v122 = vpop.f32.mrb[0].mxu0
    %v123 = vpop.f32.mrb[0].mxu0
    %v124 = vadd.f32 %v54, %v123
    %v125 = vpop.f32.mrb[0].mxu0
    %126 = vmatprep.mubr.bf16.mxu0 0
    %127 = vmatmul.mubr.bf16.gmra.mrb[0].mxu0 %v76
    %v128 = vpop.f32.mrb[0].mxu0
    %v129 = vadd.f32 %v54, %v128
    %v130 = vpop.f32.mrb[0].mxu0
    %v131 = vpop.f32.mrb[0].mxu0
    %v132 = vadd.f32 %v54, %v131
    %v133 = vpop.f32.mrb[0].mxu0
    %134 = vdwg.mxu0
    %v135 = vmax.f32 %v113, 0.0
    %v136 = vmax.f32 %v116, 0.0
    %v137 = vmax.f32 %v121, 0.0
    %v138 = vmax.f32 %v124, 0.0
    %v139 = vmax.f32 %v129, 0.0
    %v140 = vmax.f32 %v132, 0.0
    %v141 = vpack.c.bf16 %v136, %v135
    %v142 = vpack.c.bf16 %v138, %v137
    %v143 = vpack.c.bf16 %v140, %v139
    %v144 = vld [vmem:[%s3] sm:$0xf]
    %v145 = vld [vmem:[%s3 + $0x4] sm:$0xf]
    %v146 = vld [vmem:[%s3 + $0x8] sm:$0xf]
    %v147 = vld [vmem:[%s3 + $0xc] sm:$0xf]
    %v148 = vld [vmem:[%s3 + $0x10] sm:$0xf]
    %v149 = vld [vmem:[%s3 + $0x14] sm:$0xf]
    %v150 = vld [vmem:[%s3 + $0x18] sm:$0xf]
    %v151 = vld [vmem:[%s3 + $0x1c] sm:$0xf]
    %v152 = vld [vmem:[%s4] sm:$0x1]
    %v154 = vlaneseq
    %v155 = vshrl.u32 %v154, 7
    %v156 = vsub.s32 0, %v155
    %v157 = vrot.slane %v152, %v156
    %v167 = vunpack.c.l.b16 %v144
    %v168 = vunpack.c.l.b16 %v145
    %v169 = vunpack.c.l.b16 %v146
    %v170 = vunpack.c.l.b16 %v147
    %v171 = vunpack.c.l.b16 %v148
    %v172 = vunpack.c.l.b16 %v149
    %v173 = vunpack.c.l.b16 %v150
    %v174 = vunpack.c.l.b16 %v151
    %v175 = vpack.c.b16 %v168, %v167
    %v176 = vpack.c.b16 %v170, %v169
    %v177 = vpack.c.b16 %v172, %v171
    %v178 = vpack.c.b16 %v174, %v173
    %vm183 = vcmask 523264
    %v185 = vsel %vm183, %v141, 0
    %v188 = vsel %vm183, %v142, 0
    %v191 = vsel %vm183, %v143, 0
    %193 = vmatprep.subr.bf16.mxu0 0
    %194 = vmatpush1.bf16.msra.mxu0 %v175
    %195 = vmatprep.subr.bf16.mxu0 0
    %196 = vmatpush1.bf16.msra.mxu0 %v176
    %197 = vmatprep.subr.bf16.mxu0 0
    %198 = vmatpush1.bf16.msra.mxu0 %v177
    %199 = vmatprep.subr.bf16.mxu0 0
    %200 = vmatpush1.bf16.msra.mxu0 %v178
    %201 = vmatprep.subr.bf16.mxu0 0
    %202 = vmatpush1.bf16.msra.mxu0 0
    %203 = vmatprep.subr.bf16.mxu0 0
    %204 = vmatpush1.bf16.msra.mxu0 0
    %205 = vmatprep.subr.bf16.mxu0 0
    %206 = vmatpush1.bf16.msra.mxu0 0
    %207 = vmatprep.subr.bf16.mxu0 0
    %208 = vmatpush1.bf16.msra.mxu0 0
    %209 = vmatprep.subr.bf16.mxu0 0
    %210 = vmatpush1.bf16.msra.mxu0 0
    %211 = vmatprep.subr.bf16.mxu0 0
    %212 = vmatpush1.bf16.msra.mxu0 0
    %213 = vmatprep.subr.bf16.mxu0 0
    %214 = vmatpush1.bf16.msra.mxu0 0
    %215 = vmatprep.subr.bf16.mxu0 0
    %216 = vmatpush1.bf16.msra.mxu0 0
    %217 = vmatprep.subr.bf16.mxu0 0
    %218 = vmatpush1.bf16.msra.mxu0 0
    %219 = vmatprep.subr.bf16.mxu0 0
    %220 = vmatpush1.bf16.msra.mxu0 0
    %221 = vmatprep.subr.bf16.mxu0 0
    %222 = vmatpush1.bf16.msra.mxu0 0
    %223 = vmatprep.subr.bf16.mxu0 0
    %224 = vmatpush1.bf16.msra.mxu0 0
    %225 = vmatprep.mubr.bf16.mxu0 0
    %226 = vmatmul.mubr.bf16.gmra.mrb[0].mxu0 %v185
    %v227 = vpop.f32.mrb[0].mxu0
    %v228 = vadd.f32 %v157, %v227
    %v229 = vpop.f32.mrb[0].mxu0
    %v230 = vpop.f32.mrb[0].mxu0
    %v231 = vadd.f32 %v157, %v230
    %v232 = vpop.f32.mrb[0].mxu0
    %233 = vmatprep.mubr.bf16.mxu0 0
    %234 = vmatmul.mubr.bf16.gmra.mrb[0].mxu0 %v188
    %v235 = vpop.f32.mrb[0].mxu0
    %v236 = vadd.f32 %v157, %v235
    %v237 = vpop.f32.mrb[0].mxu0
    %v238 = vpop.f32.mrb[0].mxu0
    %v239 = vadd.f32 %v157, %v238
    %v240 = vpop.f32.mrb[0].mxu0
    %241 = vmatprep.mubr.bf16.mxu0 0
    %242 = vmatmul.mubr.bf16.gmra.mrb[0].mxu0 %v191
    %v243 = vpop.f32.mrb[0].mxu0
    %v244 = vadd.f32 %v157, %v243
    %v245 = vpop.f32.mrb[0].mxu0
    %v246 = vpop.f32.mrb[0].mxu0
    %v247 = vadd.f32 %v157, %v246
    %v248 = vpop.f32.mrb[0].mxu0
    %249 = vdwg.mxu0
    %250 = vst.msk [vmem:[#allocation5] sm:$0xff] %vm68, %v228
    %251 = vst.msk [vmem:[#allocation5 + $0x8] sm:$0xff] %vm68, %v231
    %252 = vst.msk [vmem:[#allocation5 + $0x10] sm:$0xff] %vm68, %v236
    %253 = vst.msk [vmem:[#allocation5 + $0x18] sm:$0xff] %vm68, %v239
    %254 = vst.msk [vmem:[#allocation5 + $0x20] sm:$0xff] %vm68, %v244
    %255 = vst.msk [vmem:[#allocation5 + $0x28] sm:$0xff] %vm68, %v247
    // Predicated region
    $region26: #{feature_encoder_forward.1} parent=1 // pred_check
      _
    $region27: #{feature_encoder_forward.1} parent=1 // pred_check_branch
      %257 = sbr.rel (0) target = $region29
    $region28: #{feature_encoder_forward.1} parent=1 // pred_region
      %s259 = ssub.s32 768, 768
      %260 = vsyncadd [#allocation4], %s259
      %s261 = sshll.u32 [#allocation5], 4
      %s262 = int_to_ptr.vmem [resolvable:$true] %s261
      %267 = dma.vmem_to_hbm [thread:$0]  %s262, 768, %s5, [#allocation4], 128, 128, 8
    $region29: #{feature_encoder_forward.1} parent=1 // pred_fallthru
      _
    // Predicated region
    $region30: #{feature_encoder_forward.1} parent=1 // pred_check
      _
    $region31: #{feature_encoder_forward.1} parent=1 // pred_check_branch
      %269 = sbr.rel (0) target = $region33
    $region32: #{feature_encoder_forward.1} parent=1 // pred_region
      %270 = dma.done [#allocation4], 768
    $region33: #{feature_encoder_forward.1} parent=1 // pred_fallthru
      _
    %271 = vsyncpa [#allocation3], 1
    %272 = vsyncpa [#allocation4], 1

</llo_original>
